<compile_context>
chip_gen: v6e
topology: v6e:2x2x1
jax: 0.10.0
libtpu: 0.0.40
codegen_flags: <defaults>
</compile_context>

<pallas_src>
import jax
import jax.numpy as jnp
from jax import lax
from jax.experimental import pallas as pl
from jax.experimental.pallas import tpu as pltpu


def _make_kernel(n_steps, tk, k_valid, k_pad):
    """Kernel factory; static tiling constants are captured by closure."""

    def kernel(c_ref, side_ref, x_ref, xn_ref, o_ref):
        # c_ref   : (tk, D)   centroid tile (stream dtype), streamed from HBM
        # side_ref: (2, tk)   row 0 = ||c||^2 (f32), row 1 = y (f32), lane-dense
        # x_ref   : (B, D)    batch of query points (stream dtype), resident
        # xn_ref  : (B, 1)    ||x||^2 (f32), resident
        # o_ref   : (1, 1, B) per-split partial losses (resident accumulator)
        @pl.when(pl.program_id(1) == 0)
        def _():
            o_ref[...] = jnp.zeros_like(o_ref)

        # MXU: (B, D) contracted with (tk, D) on D -> (B, tk), f32 accumulate.
        s = lax.dot_general(
            x_ref[...], c_ref[...],
            dimension_numbers=(((1,), (1,)), ((), ())),
            preferred_element_type=jnp.float32)                 # (B, tk)

        cn = side_ref[0:1, :]                                   # (1, tk)
        yv = side_ref[1:2, :]                                   # (1, tk)

        d_sq = jnp.maximum(cn - 2.0 * s + xn_ref[...], 0.0)     # (B, tk)
        resid = jnp.sqrt(d_sq) - yv                             # (B, tk)
        sq = resid * resid

        if k_pad != k_valid:
            # Mask zero-padded centroid rows (trace-time constant K).
            k_base = (pl.program_id(0) * n_steps + pl.program_id(1)) * tk
            lane = lax.broadcasted_iota(jnp.int32, (1, tk), 1)
            sq = jnp.where(k_base + lane < k_valid, sq, 0.0)

        # Partial loss for this centroid tile: reduce over the tk lanes.
        o_ref[...] += (0.5 * jnp.sum(sq, axis=1)).reshape(1, 1, o_ref.shape[-1])

    return kernel


def spherical_intersection_losses(centroids, y, X, *,
                                  stream_dtype=jnp.bfloat16,
                                  tile_k=None,
                                  tile_bytes=4 << 20,
                                  num_k_splits=2):
    """Batched loss: centroids (K, D), y (K,) or (K,1), X (B, ...) -> (B,) losses."""
    def rup(a, b):
        return -(-a // b) * b

    centroids = jnp.asarray(centroids, jnp.float32)
    K, D = centroids.shape
    X = jnp.asarray(X, jnp.float32).reshape(X.shape[0], -1)     # (B, D)
    B = X.shape[0]
    y_flat = jnp.asarray(y, jnp.float32).reshape(-1)            # (K,)

    # Precision guard for the Gram form: center on the batch mean (exact no-op).
    mu = jnp.mean(X, axis=0, keepdims=True)
    Xc = X - mu
    Cc = centroids - mu

    # Fixed-at-init preprocessing (hoist out of the hot path in a real module).
    Cs = Cc.astype(stream_dtype)                                 # streamed operand
    cn = jnp.sum(Cs.astype(jnp.float32) ** 2, axis=1)            # (K,) f32 (exact for rounded c)
    side = jnp.stack([cn, y_flat], axis=0)                       # (2, K) lane-dense
    Xs = Xc.astype(stream_dtype)                                 # (B, D)
    xn = jnp.sum(Xs.astype(jnp.float32) ** 2, axis=1, keepdims=True)  # (B, 1) f32

    itemsize = jnp.dtype(stream_dtype).itemsize
    d_pad = rup(D, 128)                    # lane-padded row width in VMEM

    # K split over a leading "parallel" grid axis (feeds v7x's second TC).
    n_splits = max(1, min(int(num_k_splits), pl.cdiv(K, 128)))

    # Tile size: target a multi-MiB VMEM tile, multiple of 128 lanes.
    if tile_k is None:
        tk = (int(tile_bytes) // (d_pad * itemsize)) // 128 * 128
    else:
        tk = (int(tile_k) // 128) * 128
    tk = max(128, tk)
    # Cap so the double-buffered centroid tile stays well inside scoped VMEM
    # (<= 8 MiB per buffer; vmem_limit_bytes=32 MiB is valid on v5e/v6e/v7x).
    tk = min(tk, max(128, ((8 << 20) // (d_pad * itemsize)) // 128 * 128))
    # No point in a tile larger than one split's worth of (padded) K.
    tk = min(tk, rup(pl.cdiv(K, n_splits), 128))

    n_steps = pl.cdiv(K, n_splits * tk)
    k_pad = n_splits * n_steps * tk

    if k_pad != K:
        Cs = jnp.pad(Cs, ((0, k_pad - K), (0, 0)))
        side = jnp.pad(side, ((0, 0), (0, k_pad - K)))

    kernel = _make_kernel(n_steps=n_steps, tk=tk, k_valid=K, k_pad=k_pad)

    out = pl.pallas_call(
        kernel,
        out_shape=jax.ShapeDtypeStruct((n_splits, 1, B), jnp.float32),
        grid_spec=pltpu.PrefetchScalarGridSpec(
            num_scalar_prefetch=0,
            grid=(n_splits, n_steps),
            in_specs=[
                pl.BlockSpec((tk, D), lambda s, i: (s * n_steps + i, 0)),  # centroid tile
                pl.BlockSpec((2, tk), lambda s, i: (0, s * n_steps + i)),  # fused ||c||^2 / y
                pl.BlockSpec((B, D), lambda s, i: (0, 0)),                 # X (resident)
                pl.BlockSpec((B, 1), lambda s, i: (0, 0)),                 # ||x||^2 (resident)
            ],
            out_specs=pl.BlockSpec((1, 1, B), lambda s, i: (s, 0, 0)),
        ),
        compiler_params=pltpu.CompilerParams(
            dimension_semantics=("parallel", "arbitrary"),
            vmem_limit_bytes=int(32 * 2 ** 20),
        ),
    )(Cs, side, Xs, xn)

    # Trivial XLA reduction over the K splits.
    return out.sum(axis=0).reshape(B)


def spherical_intersection_loss(centroids, y, x, **kwargs):
    """Single-x forward, identical semantics to the PyTorch module."""
    return spherical_intersection_losses(
        centroids, y, jnp.asarray(x).reshape(1, -1), **kwargs)[0]


if __name__ == "__main__":
    key = jax.random.PRNGKey(0)
    k_c, k_y, k_x = jax.random.split(key, 3)

    # Ragged K (exercises pad+mask), 2 K-splits x 2 K-steps, small batch B=8.
    K, D, B = 1000, 32, 8
    centroids = jax.random.normal(k_c, (K, D), dtype=jnp.float32)
    y_true = jax.random.uniform(k_y, (K,), dtype=jnp.float32) * 2.0 + 0.5
    X = jax.random.normal(k_x, (B, D), dtype=jnp.float32)

    # Pure-JAX reference (same math as the PyTorch forward, per batch element).
    diffs = centroids[None, :, :] - X[:, None, :]                 # (B, K, D)
    d_est = jnp.sqrt(jnp.sum(diffs * diffs, axis=-1))             # (B, K)
    ref = 0.5 * jnp.sum((d_est - y_true[None, :]) ** 2, axis=1)   # (B,)

    # f32 streaming: exact-path check.
    losses_f32 = jax.block_until_ready(
        spherical_intersection_losses(centroids, y_true, X,
                                      stream_dtype=jnp.float32, tile_k=256))
    assert jnp.allclose(losses_f32, ref, rtol=1e-4, atol=1e-4), (losses_f32, ref)

    # Default bf16 streaming: halves HBM traffic for the bandwidth-critical operand.
    losses_bf16 = jax.block_until_ready(
        spherical_intersection_losses(centroids, y_true, X, tile_k=256))
    assert jnp.allclose(losses_bf16, ref, rtol=2e-2, atol=1e-1), (losses_bf16, ref)

    # Single-x path (the exact module signature).
    loss0 = jax.block_until_ready(
        spherical_intersection_loss(centroids, y_true, X[0],
                                    stream_dtype=jnp.float32))
    assert jnp.allclose(loss0, ref[0], rtol=1e-4, atol=1e-4), (loss0, ref[0])

    print("KERNEL_OK")
</pallas_src>

<mosaic_0001>
module attributes {stable_mosaic.version = 11 : i64} {
  func.func @kernel(%arg0: i32, %arg1: i32, %arg2: memref<256x32xf32, #tpu.memory_space<vmem>>, %arg3: memref<2x256xf32, #tpu.memory_space<vmem>>, %arg4: memref<8x32xf32, #tpu.memory_space<vmem>>, %arg5: memref<8x1xf32, #tpu.memory_space<vmem>>, %arg6: memref<1x1x8xf32, #tpu.memory_space<vmem>>) attributes {dimension_semantics = [#tpu.dimension_semantics<parallel>, #tpu.dimension_semantics<arbitrary>], iteration_bounds = array<i64: 2, 2>, scalar_prefetch = 0 : i64, scratch_operands = 0 : i64, tpu.core_type = #tpu.core_type<tc>, window_params = [{transform_indices = @transform_0, window_bounds = array<i64: 256, 32>}, {transform_indices = @transform_1, window_bounds = array<i64: 2, 256>}, {pipeline_mode = #tpu.pipeline_mode<synchronous>, transform_indices = @transform_2, window_bounds = array<i64: 8, 32>}, {pipeline_mode = #tpu.pipeline_mode<synchronous>, transform_indices = @transform_3, window_bounds = array<i64: 8, 1>}, {transform_indices = @transform_4, window_bounds = array<i64: 1, 1, 8>}]} {
    %c0_i32 = arith.constant 0 : i32
    %0 = arith.cmpi eq, %arg1, %c0_i32 : i32
    %1 = arith.extui %0 : i1 to i32
    %c0_i32_0 = arith.constant 0 : i32
    %2 = arith.cmpi ne, %1, %c0_i32_0 : i32
    scf.if %2 {
      %cst_20 = arith.constant 0.000000e+00 : f32
      %40 = vector.broadcast %cst_20 : f32 to vector<1x1x8xf32>
      %c0_21 = arith.constant 0 : index
      %c0_22 = arith.constant 0 : index
      %c0_23 = arith.constant 0 : index
      %41 = vector.load %arg6[%c0_21, %c0_22, %c0_23] : memref<1x1x8xf32, #tpu.memory_space<vmem>>, vector<1x1x8xf32>
      tpu.vector_store %arg6[%c0_21, %c0_22, %c0_23], %40 {strides = array<i32>} : memref<1x1x8xf32, #tpu.memory_space<vmem>>, vector<1x1x8xf32>,
    } else {
    }
    %c0 = arith.constant 0 : index
    %c0_1 = arith.constant 0 : index
    %3 = vector.load %arg4[%c0, %c0_1] : memref<8x32xf32, #tpu.memory_space<vmem>>, vector<8x32xf32>
    %c0_2 = arith.constant 0 : index
    %c0_3 = arith.constant 0 : index
    %4 = vector.load %arg2[%c0_2, %c0_3] : memref<256x32xf32, #tpu.memory_space<vmem>>, vector<256x32xf32>
    %cst = arith.constant dense<0.000000e+00> : vector<8x256xf32>
    %5 = tpu.matmul %3, %4, %cst {dimension_numbers = #tpu.dot_dimension_numbers<[1], [1], [0], [0], [0, 0, 1, 0], [], []>} : vector<8x32xf32>, vector<256x32xf32>, vector<8x256xf32> -> vector<8x256xf32>
    %c0_4 = arith.constant 0 : index
    %c0_5 = arith.constant 0 : index
    %6 = vector.load %arg3[%c0_4, %c0_5] : memref<2x256xf32, #tpu.memory_space<vmem>>, vector<1x256xf32>
    %c1 = arith.constant 1 : index
    %c0_6 = arith.constant 0 : index
    %7 = vector.load %arg3[%c1, %c0_6] : memref<2x256xf32, #tpu.memory_space<vmem>>, vector<1x256xf32>
    %cst_7 = arith.constant 2.000000e+00 : f32
    %8 = vector.broadcast %cst_7 : f32 to vector<8x256xf32>
    %9 = arith.mulf %8, %5 : vector<8x256xf32>
    %10 = vector.broadcast %6 : vector<1x256xf32> to vector<8x256xf32>
    %11 = arith.subf %10, %9 : vector<8x256xf32>
    %c0_8 = arith.constant 0 : index
    %c0_9 = arith.constant 0 : index
    %12 = vector.load %arg5[%c0_8, %c0_9] : memref<8x1xf32, #tpu.memory_space<vmem>>, vector<8x1xf32>
    %13 = vector.broadcast %12 : vector<8x1xf32> to vector<8x256xf32>
    %14 = arith.addf %11, %13 : vector<8x256xf32>
    %cst_10 = arith.constant 0.000000e+00 : f32
    %15 = vector.broadcast %cst_10 : f32 to vector<8x256xf32>
    %16 = arith.maximumf %14, %15 : vector<8x256xf32>
    %17 = math.sqrt %16 : vector<8x256xf32>
    %18 = vector.broadcast %7 : vector<1x256xf32> to vector<8x256xf32>
    %19 = arith.subf %17, %18 : vector<8x256xf32>
    %20 = arith.mulf %19, %19 : vector<8x256xf32>
    %c2_i32 = arith.constant 2 : i32
    %21 = arith.muli %arg0, %c2_i32 : i32
    %22 = arith.addi %21, %arg1 : i32
    %c256_i32 = arith.constant 256 : i32
    %23 = arith.muli %22, %c256_i32 : i32
    %24 = tpu.iota {dimensions = array<i32: 1>} : vector<1x256xi32>
    %25 = vector.broadcast %23 : i32 to vector<1x256xi32>
    %26 = arith.addi %25, %24 : vector<1x256xi32>
    %c1000_i32 = arith.constant 1000 : i32
    %27 = vector.broadcast %c1000_i32 : i32 to vector<1x256xi32>
    %28 = arith.cmpi slt, %26, %27 : vector<1x256xi32>
    %cst_11 = arith.constant 0.000000e+00 : f32
    %29 = vector.shape_cast %28 : vector<1x256xi1> to vector<1x256xi1>
    %30 = vector.broadcast %29 : vector<1x256xi1> to vector<8x256xi1>
    %31 = vector.broadcast %cst_11 : f32 to vector<8x256xf32>
    %32 = arith.select %30, %20, %31 : vector<8x256xi1>, vector<8x256xf32>
    %c0_12 = arith.constant 0 : index
    %c0_13 = arith.constant 0 : index
    %c0_14 = arith.constant 0 : index
    %33 = vector.load %arg6[%c0_12, %c0_13, %c0_14] : memref<1x1x8xf32, #tpu.memory_space<vmem>>, vector<1x1x8xf32>
    %cst_15 = arith.constant dense<0.000000e+00> : vector<8xf32>
    %34 = vector.multi_reduction <add>, %32, %cst_15 [1] : vector<8x256xf32> to vector<8xf32>
    %cst_16 = arith.constant 5.000000e-01 : f32
    %35 = vector.broadcast %cst_16 : f32 to vector<8xf32>
    %36 = arith.mulf %35, %34 : vector<8xf32>
    %37 = vector.shape_cast %36 : vector<8xf32> to vector<1x1x8xf32>
    %38 = arith.addf %33, %37 : vector<1x1x8xf32>
    %c0_17 = arith.constant 0 : index
    %c0_18 = arith.constant 0 : index
    %c0_19 = arith.constant 0 : index
    %39 = vector.load %arg6[%c0_17, %c0_18, %c0_19] : memref<1x1x8xf32, #tpu.memory_space<vmem>>, vector<1x1x8xf32>
    tpu.vector_store %arg6[%c0_17, %c0_18, %c0_19], %38 {strides = array<i32>} : memref<1x1x8xf32, #tpu.memory_space<vmem>>, vector<1x1x8xf32>,
    return
  }
  func.func @transform_0(%arg0: i32, %arg1: i32) -> (i32, i32) {
    %c2_i32 = arith.constant 2 : i32
    %0 = arith.muli %arg0, %c2_i32 : i32
    %1 = arith.addi %0, %arg1 : i32
    %c0_i32 = arith.constant 0 : i32
    %c0_i32_0 = arith.constant 0 : i32
    return %1, %c0_i32 : i32, i32
  }
  func.func @transform_1(%arg0: i32, %arg1: i32) -> (i32, i32) {
    %c2_i32 = arith.constant 2 : i32
    %0 = arith.muli %arg0, %c2_i32 : i32
    %1 = arith.addi %0, %arg1 : i32
    %c0_i32 = arith.constant 0 : i32
    %c0_i32_0 = arith.constant 0 : i32
    return %c0_i32, %1 : i32, i32
  }
  func.func @transform_2(%arg0: i32, %arg1: i32) -> (i32, i32) {
    %c0_i32 = arith.constant 0 : i32
    %c0_i32_0 = arith.constant 0 : i32
    %c0_i32_1 = arith.constant 0 : i32
    return %c0_i32, %c0_i32_0 : i32, i32
  }
  func.func @transform_3(%arg0: i32, %arg1: i32) -> (i32, i32) {
    %c0_i32 = arith.constant 0 : i32
    %c0_i32_0 = arith.constant 0 : i32
    %c0_i32_1 = arith.constant 0 : i32
    return %c0_i32, %c0_i32_0 : i32, i32
  }
  func.func @transform_4(%arg0: i32, %arg1: i32) -> (i32, i32, i32) {
    %c0_i32 = arith.constant 0 : i32
    %c0_i32_0 = arith.constant 0 : i32
    %c0_i32_1 = arith.constant 0 : i32
    return %arg0, %c0_i32, %c0_i32_0 : i32, i32, i32
  }
}

</mosaic_0001>

<llo_original>
// kernel: tpu_custom_call.1
$region0: #{tpu_custom_call.1}
  #allocation0 [shape = 'u32[]', space=smem, size = 0x4, offset = 0x4, fixed_abs, tag = 'smem constant byte address 0x4 - core index']
  #allocation1 [shape = 'u32[144,128]{1,0:T(1,128)}', space=vmem, size = 0x12000, scoped, tag = 'internal scratch']
  %s0 = inlined_call_operand.vmem [shape: f32[1024,32], index: 0, kind: input, shape index: {}]
  %s1 = inlined_call_operand.vmem [shape: f32[2,1024], index: 1, kind: input, shape index: {}]
  %s2 = inlined_call_operand.vmem [shape: f32[8,32], index: 2, kind: input, shape index: {}]
  %s3 = inlined_call_operand.vmem [shape: f32[8,1], index: 3, kind: input, shape index: {}]
  %s4 = inlined_call_operand.hbm [shape: f32[2,1,8], index: 4, kind: output, shape index: {}]
  %s5 = sld [smem:[#allocation0]]
  $region53: #{tpu_custom_call.1} parent=0
    _
  %s7 = ssub.s32 1, %s5
  %s8 = scalar_select 0, %s7, %s5
  $region1: #{tpu_custom_call.1} parent=0
    #allocation2 [shape = 'u8[1024]{0}', space=vmem, size = 0x400, scoped, tag = 'output window, operand 0']
    #allocation3 [shape = 's32[2]{0}', space=sflag, size = 0x8, scoped, tag = 'scoped memory for tpu_custom_call.1']
    %9 = vsyncpa [#allocation3], 0
    %s10 = scalar_lea.sflag [#allocation3], 1
    %11 = vsyncpa %s10, 0
    loop: start=0, step=1, limit=6
    $region2: #{tpu_custom_call.1} parent=1 // loop_pre_header
      _
    $region3: #{tpu_custom_call.1} parent=1 // loop_header
      %s13 = sphi 0, %s17
      %p14 = scmp.ge.s32.totalorder %s13, 6
      %s20 = sphi 0, %s32
      %s21 = sphi 0, %s28
      %s22 = sphi 0, %s20
      %s23 = sphi 0, %s21
      %s24 = sphi 0, %s22
      %s25 = sphi 0, %s23
      %s39 = sphi 0, %s41
      %s42 = sphi 0, %s39
      %s43 = sphi 0, %s42
      %s59 = sphi 0, %s43
      %s69 = sphi 0, %s71
      %s72 = sphi 0, %s69
      %s73 = sphi 0, %s72
      %s89 = sphi 0, %s73
      %s93 = sphi 0, %s93
      %s95 = sphi 0, %s93
      %s96 = sphi 0, %s95
      %s110 = sphi 0, %s96
      %s114 = sphi 0, %s114
      %s116 = sphi 0, %s114
      %s117 = sphi 0, %s116
      %s131 = sphi 0, %s117
      %s137 = sphi 0, %s139
      %s140 = sphi 0, %s137
      %s141 = sphi 0, %s140
      %s157 = sphi 0, %s141
    $region4: #{tpu_custom_call.1} parent=1 // loop_header_branch
      %16 = sbr.rel (%p14) target = $region8
    $region5: #{tpu_custom_call.1} parent=1 // loop_body
      %s18 = ssub.s32 %s13, 1
      %s19 = ssub.s32 %s13, 2
      %s26 = sadd.s32 1, %s21
      %p27 = scmp.ge.s32.totalorder %s26, 2
      %s28 = scalar_select %p27, 0, %s26
      %s29 = sadd.s32 1, %s20
      %s30 = scalar_select %p27, %s29, %s20
      %p31 = scmp.ge.s32.totalorder %s30, 2
      %s32 = scalar_select %p31, 0, %s30
      %s33 = smul.u32 %s20, 2
      %s34 = sadd.s32 %s33, %s21
      %s35 = smul.u32 %s32, 2
      %s36 = sadd.s32 %s35, %s28
      %s37 = ssub.s32 %s34, %s36
      %p38 = scmp.eq.s32.totalorder %s37, 0
      %s40 = sadd.s32 %s39, 1
      %s41 = scalar_select %p38, %s39, %s40
      %p44 = pneg %p38
      %p45 = scmp.eq.s32.totalorder %s13, 3
      %p46 = por %p44, %p45
      %p47 = scmp.ne.s32.totalorder %s39, %s42
      %p48 = scmp.eq.s32.totalorder %s13, 0
      %p49 = por %p47, %p48
      %p50 = scmp.ne.s32.totalorder %s39, %s42
      %p51 = scmp.eq.s32.totalorder %s18, 3
      %p52 = por %p50, %p51
      %p53 = scmp.ne.s32.totalorder %s42, %s43
      %p54 = scmp.eq.s32.totalorder %s18, 0
      %p55 = por %p53, %p54
      %p56 = scmp.ne.s32.totalorder %s42, %s43
      %p57 = scmp.eq.s32.totalorder %s19, 3
      %p58 = por %p56, %p57
      %p60 = scmp.ne.s32.totalorder %s43, %s59
      %p61 = scmp.eq.s32.totalorder %s19, 0
      %p62 = por %p60, %p61
      %s63 = smul.u32 %s20, 2
      %s64 = sadd.s32 %s63, %s21
      %s65 = smul.u32 %s32, 2
      %s66 = sadd.s32 %s65, %s28
      %s67 = ssub.s32 %s64, %s66
      %p68 = scmp.eq.s32.totalorder %s67, 0
      %s70 = sadd.s32 %s69, 1
      %s71 = scalar_select %p68, %s69, %s70
      %p74 = pneg %p68
      %p75 = scmp.eq.s32.totalorder %s13, 3
      %p76 = por %p74, %p75
      %p77 = scmp.ne.s32.totalorder %s69, %s72
      %p78 = scmp.eq.s32.totalorder %s13, 0
      %p79 = por %p77, %p78
      %p80 = scmp.ne.s32.totalorder %s69, %s72
      %p81 = scmp.eq.s32.totalorder %s18, 3
      %p82 = por %p80, %p81
      %p83 = scmp.ne.s32.totalorder %s72, %s73
      %p84 = scmp.eq.s32.totalorder %s18, 0
      %p85 = por %p83, %p84
      %p86 = scmp.ne.s32.totalorder %s72, %s73
      %p87 = scmp.eq.s32.totalorder %s19, 3
      %p88 = por %p86, %p87
      %p90 = scmp.ne.s32.totalorder %s73, %s89
      %p91 = scmp.eq.s32.totalorder %s19, 0
      %p92 = por %p90, %p91
      %s94 = sadd.s32 %s93, 1
      %p97 = scmp.eq.s32.totalorder %s13, 3
      %p98 = scmp.ne.s32.totalorder %s93, %s95
      %p99 = scmp.eq.s32.totalorder %s13, 0
      %p100 = por %p98, %p99
      %p101 = scmp.ne.s32.totalorder %s93, %s95
      %p102 = scmp.eq.s32.totalorder %s18, 3
      %p103 = por %p101, %p102
      %p104 = scmp.ne.s32.totalorder %s95, %s96
      %p105 = scmp.eq.s32.totalorder %s18, 0
      %p106 = por %p104, %p105
      %p107 = scmp.ne.s32.totalorder %s95, %s96
      %p108 = scmp.eq.s32.totalorder %s19, 3
      %p109 = por %p107, %p108
      %p111 = scmp.ne.s32.totalorder %s96, %s110
      %p112 = scmp.eq.s32.totalorder %s19, 0
      %p113 = por %p111, %p112
      %s115 = sadd.s32 %s114, 1
      %p118 = scmp.eq.s32.totalorder %s13, 3
      %p119 = scmp.ne.s32.totalorder %s114, %s116
      %p120 = scmp.eq.s32.totalorder %s13, 0
      %p121 = por %p119, %p120
      %p122 = scmp.ne.s32.totalorder %s114, %s116
      %p123 = scmp.eq.s32.totalorder %s18, 3
      %p124 = por %p122, %p123
      %p125 = scmp.ne.s32.totalorder %s116, %s117
      %p126 = scmp.eq.s32.totalorder %s18, 0
      %p127 = por %p125, %p126
      %p128 = scmp.ne.s32.totalorder %s116, %s117
      %p129 = scmp.eq.s32.totalorder %s19, 3
      %p130 = por %p128, %p129
      %p132 = scmp.ne.s32.totalorder %s117, %s131
      %p133 = scmp.eq.s32.totalorder %s19, 0
      %p134 = por %p132, %p133
      %s135 = ssub.s32 %s20, %s32
      %p136 = scmp.eq.s32.totalorder %s135, 0
      %s138 = sadd.s32 %s137, 1
      %s139 = scalar_select %p136, %s137, %s138
      %p142 = pneg %p136
      %p143 = scmp.eq.s32.totalorder %s13, 3
      %p144 = por %p142, %p143
      %p145 = scmp.ne.s32.totalorder %s137, %s140
      %p146 = scmp.eq.s32.totalorder %s13, 0
      %p147 = por %p145, %p146
      %p148 = scmp.ne.s32.totalorder %s137, %s140
      %p149 = scmp.eq.s32.totalorder %s18, 3
      %p150 = por %p148, %p149
      %p151 = scmp.ne.s32.totalorder %s140, %s141
      %p152 = scmp.eq.s32.totalorder %s18, 0
      %p153 = por %p151, %p152
      %p154 = scmp.ne.s32.totalorder %s140, %s141
      %p155 = scmp.eq.s32.totalorder %s19, 3
      %p156 = por %p154, %p155
      %p158 = scmp.ne.s32.totalorder %s141, %s157
      %p159 = scmp.eq.s32.totalorder %s19, 0
      %p160 = por %p158, %p159
      %p161 = scmp.le.s32.totalorder 1, %s13
      %p162 = scmp.lt.s32.totalorder %s13, 5
      %p163 = pnand %p161, %p162
      %p164 = pneg %p163
      // Predicated region
      $region9: #{tpu_custom_call.1} parent=5 // pred_check
        _
      $region10: #{tpu_custom_call.1} parent=5 // pred_check_branch
        %166 = sbr.rel (%p163) target = $region12
      $region11: #{tpu_custom_call.1} parent=5 // pred_region
        %s167 = ssub.s32 %s13, 1
        // Predicated region
        $region13: #{tpu_custom_call.1} parent=11 // pred_check
          %p168 = pneg %p106
        $region14: #{tpu_custom_call.1} parent=11 // pred_check_branch
          %170 = sbr.rel (%p168) target = $region16
        $region15: #{tpu_custom_call.1} parent=11 // pred_region
          _
        $region16: #{tpu_custom_call.1} parent=11 // pred_fallthru
          _
        // Predicated region
        $region17: #{tpu_custom_call.1} parent=11 // pred_check
          %p171 = pneg %p127
        $region18: #{tpu_custom_call.1} parent=11 // pred_check_branch
          %173 = sbr.rel (%p171) target = $region20
        $region19: #{tpu_custom_call.1} parent=11 // pred_region
          _
        $region20: #{tpu_custom_call.1} parent=11 // pred_fallthru
          _
      $region12: #{tpu_custom_call.1} parent=5 // pred_fallthru
        _
      %p174 = scmp.lt.s32.totalorder %s13, 4
      // Predicated region
      $region21: #{tpu_custom_call.1} parent=5 // pred_check
        %p175 = pneg %p174
      $region22: #{tpu_custom_call.1} parent=5 // pred_check_branch
        %177 = sbr.rel (%p175) target = $region24
      $region23: #{tpu_custom_call.1} parent=5 // pred_region
        // Predicated region
        $region25: #{tpu_custom_call.1} parent=23 // pred_check
          %p178 = pneg %p49
        $region26: #{tpu_custom_call.1} parent=23 // pred_check_branch
          %180 = sbr.rel (%p178) target = $region28
        $region27: #{tpu_custom_call.1} parent=23 // pred_region
          %s181 = smul.u32 %s20, 2
          %s182 = sadd.s32 %s181, %s21
          %s183 = smul.u32 32, %s182
          %p184 = scmp.lt.s32.totalorder %s183, 127
          %s185 = scalar_select %p184, %s183, 127
          %s186 = smul.addr %s185, 8
          %s187 = scalar_lea.vmem %s0, %s186
          %s188 = smul.u32 %s20, 2
          %s189 = sadd.s32 %s188, %s21
          %s190 = smul.u32 32, %s189
        $region28: #{tpu_custom_call.1} parent=23 // pred_fallthru
          _
        // Predicated region
        $region29: #{tpu_custom_call.1} parent=23 // pred_check
          %p191 = pneg %p79
        $region30: #{tpu_custom_call.1} parent=23 // pred_check_branch
          %193 = sbr.rel (%p191) target = $region32
        $region31: #{tpu_custom_call.1} parent=23 // pred_region
          %s194 = smul.u32 %s20, 2
          %s195 = sadd.s32 %s194, %s21
          %s196 = smul.u32 2, %s195
          %p197 = scmp.lt.s32.totalorder %s196, 7
          %s198 = scalar_select %p197, %s196, 7
          %s199 = smul.addr %s198, 2
          %s200 = scalar_lea.vmem %s1, %s199
          %s201 = smul.u32 %s20, 2
          %s202 = sadd.s32 %s201, %s21
          %s203 = smul.u32 2, %s202
        $region32: #{tpu_custom_call.1} parent=23 // pred_fallthru
          _
      $region24: #{tpu_custom_call.1} parent=5 // pred_fallthru
        _
      %p204 = scmp.le.s32.totalorder 1, %s13
      %p205 = scmp.lt.s32.totalorder %s13, 5
      %p206 = pnand %p204, %p205
      %p207 = pneg %p206
      // Predicated region
      $region33: #{tpu_custom_call.1} parent=5 // pred_check
        _
      $region34: #{tpu_custom_call.1} parent=5 // pred_check_branch
        %209 = sbr.rel (%p206) target = $region36
      $region35: #{tpu_custom_call.1} parent=5 // pred_region
        %s210 = ssub.s32 %s13, 1
        %s211 = smul.u32 %s22, 2
        %s212 = sadd.s32 %s211, %s23
        %s213 = smul.u32 32, %s212
        %p214 = scmp.lt.s32.totalorder %s213, 127
        %s215 = scalar_select %p214, %s213, 127
        %s216 = smul.addr %s215, 8
        %s217 = scalar_lea.vmem %s0, %s216
        %p218 = pneg %p55
        %p219 = pneg %p52
        %s220 = smul.u32 %s22, 2
        %s221 = sadd.s32 %s220, %s23
        %s222 = smul.u32 2, %s221
        %p223 = scmp.lt.s32.totalorder %s222, 7
        %s224 = scalar_select %p223, %s222, 7
        %s225 = smul.addr %s224, 2
        %s226 = scalar_lea.vmem %s1, %s225
        %p227 = pneg %p85
        %p228 = pneg %p82
        %p229 = pneg %p106
        %p230 = pneg %p103
        %p231 = pneg %p127
        %p232 = pneg %p124
        %p233 = pneg %p153
        %p234 = pneg %p150
        %s235 = sand.u32 %s140, 1
        %s236 = scalar_lea.sflag [#allocation3], %s235
        %s237 = sand.u32 %s140, 1
        %s238 = scalar_lea.vmem [#allocation2], %s237
        %s239 = smul.u32 %s22, 2
        %s240 = sadd.s32 %s239, %s23
        %s241 = smul.u32 32, %s240
        %p242 = scmp.lt.s32.totalorder %s241, 127
        %s243 = scalar_select %p242, %s241, 127
        %s244 = smul.addr %s243, 8
        %s245 = scalar_lea.vmem %s0, %s244
        %s246 = smul.u32 %s22, 2
        %s247 = sadd.s32 %s246, %s23
        %s248 = smul.u32 32, %s247
        %s249 = smul.u32 %s22, 2
        %s250 = sadd.s32 %s249, %s23
        %s251 = smul.u32 2, %s250
        %p252 = scmp.lt.s32.totalorder %s251, 7
        %s253 = scalar_select %p252, %s251, 7
        %s254 = smul.addr %s253, 2
        %s255 = scalar_lea.vmem %s1, %s254
        %s256 = smul.u32 %s22, 2
        %s257 = sadd.s32 %s256, %s23
        %s258 = smul.u32 2, %s257
        %p259 = scmp.eq.s32.totalorder %s23, 0
        // Predicated region
        $region37: #{tpu_custom_call.1} parent=35 // pred_check
          %p260 = pneg %p259
        $region38: #{tpu_custom_call.1} parent=35 // pred_check_branch
          %262 = sbr.rel (%p260) target = $region40
        $region39: #{tpu_custom_call.1} parent=35 // pred_region
          %vm263 = vcmask 57344
          %264 = vst.msk [vmem:[%s238] sm:$0x1] %vm263, 0.0
        $region40: #{tpu_custom_call.1} parent=35 // pred_fallthru
          _
        %v265 = vld [vmem:[%s2] sm:$0xff]
        %v266 = vld [vmem:[%s245] sm:$0xff]
        %v267 = vld [vmem:[%s245 + $0x8] sm:$0xff]
        %v268 = vld [vmem:[%s245 + $0x10] sm:$0xff]
        %v269 = vld [vmem:[%s245 + $0x18] sm:$0xff]
        %v270 = vld [vmem:[%s245 + $0x20] sm:$0xff]
        %v271 = vld [vmem:[%s245 + $0x28] sm:$0xff]
        %v272 = vld [vmem:[%s245 + $0x30] sm:$0xff]
        %v273 = vld [vmem:[%s245 + $0x38] sm:$0xff]
        %v274 = vld [vmem:[%s245 + $0x40] sm:$0xff]
        %v275 = vld [vmem:[%s245 + $0x48] sm:$0xff]
        %v276 = vld [vmem:[%s245 + $0x50] sm:$0xff]
        %v277 = vld [vmem:[%s245 + $0x58] sm:$0xff]
        %v278 = vld [vmem:[%s245 + $0x60] sm:$0xff]
        %v279 = vld [vmem:[%s245 + $0x68] sm:$0xff]
        %v280 = vld [vmem:[%s245 + $0x70] sm:$0xff]
        %v281 = vld [vmem:[%s245 + $0x78] sm:$0xff]
        %v282 = vld [vmem:[%s245 + $0x80] sm:$0xff]
        %v283 = vld [vmem:[%s245 + $0x88] sm:$0xff]
        %v284 = vld [vmem:[%s245 + $0x90] sm:$0xff]
        %v285 = vld [vmem:[%s245 + $0x98] sm:$0xff]
        %v286 = vld [vmem:[%s245 + $0xa0] sm:$0xff]
        %v287 = vld [vmem:[%s245 + $0xa8] sm:$0xff]
        %v288 = vld [vmem:[%s245 + $0xb0] sm:$0xff]
        %v289 = vld [vmem:[%s245 + $0xb8] sm:$0xff]
        %v290 = vld [vmem:[%s245 + $0xc0] sm:$0xff]
        %v291 = vld [vmem:[%s245 + $0xc8] sm:$0xff]
        %v292 = vld [vmem:[%s245 + $0xd0] sm:$0xff]
        %v293 = vld [vmem:[%s245 + $0xd8] sm:$0xff]
        %v294 = vld [vmem:[%s245 + $0xe0] sm:$0xff]
        %v295 = vld [vmem:[%s245 + $0xe8] sm:$0xff]
        %v296 = vld [vmem:[%s245 + $0xf0] sm:$0xff]
        %v297 = vld [vmem:[%s245 + $0xf8] sm:$0xff]
        %vm298 = vcmask 261120
        %v300 = vsel %vm298, %v265, 0
        %v303 = vsel %vm298, %v266, 0
        %v306 = vsel %vm298, %v267, 0
        %v309 = vsel %vm298, %v268, 0
        %v312 = vsel %vm298, %v269, 0
        %v315 = vsel %vm298, %v270, 0
        %v318 = vsel %vm298, %v271, 0
        %v321 = vsel %vm298, %v272, 0
        %v324 = vsel %vm298, %v273, 0
        %v327 = vsel %vm298, %v274, 0
        %v330 = vsel %vm298, %v275, 0
        %v333 = vsel %vm298, %v276, 0
        %v336 = vsel %vm298, %v277, 0
        %v339 = vsel %vm298, %v278, 0
        %v342 = vsel %vm298, %v279, 0
        %v345 = vsel %vm298, %v280, 0
        %v348 = vsel %vm298, %v281, 0
        %v351 = vsel %vm298, %v282, 0
        %v354 = vsel %vm298, %v283, 0
        %v357 = vsel %vm298, %v284, 0
        %v360 = vsel %vm298, %v285, 0
        %v363 = vsel %vm298, %v286, 0
        %v366 = vsel %vm298, %v287, 0
        %v369 = vsel %vm298, %v288, 0
        %v372 = vsel %vm298, %v289, 0
        %v375 = vsel %vm298, %v290, 0
        %v378 = vsel %vm298, %v291, 0
        %v381 = vsel %vm298, %v292, 0
        %v384 = vsel %vm298, %v293, 0
        %v387 = vsel %vm298, %v294, 0
        %v390 = vsel %vm298, %v295, 0
        %v393 = vsel %vm298, %v296, 0
        %v396 = vsel %vm298, %v297, 0
        %398 = vmatprep.subr.mxu0 0.0
        %399 = vmatpush1.xpose.msra.mxu0 %v348
        %400 = vmatprep.subr.mxu0 0.0
        %401 = vmatpush1.xpose.msra.mxu0 %v345
        %402 = vmatprep.subr.mxu0 0.0
        %403 = vmatpush1.xpose.msra.mxu0 %v342
        %404 = vmatprep.subr.mxu0 0.0
        %405 = vmatpush1.xpose.msra.mxu0 %v339
        %406 = vmatprep.subr.mxu0 0.0
        %407 = vmatpush1.xpose.msra.mxu0 %v336
        %408 = vmatprep.subr.mxu0 0.0
        %409 = vmatpush1.xpose.msra.mxu0 %v333
        %410 = vmatprep.subr.mxu0 0.0
        %411 = vmatpush1.xpose.msra.mxu0 %v330
        %412 = vmatprep.subr.mxu0 0.0
        %413 = vmatpush1.xpose.msra.mxu0 %v327
        %414 = vmatprep.subr.mxu0 0.0
        %415 = vmatpush1.xpose.msra.mxu0 %v324
        %416 = vmatprep.subr.mxu0 0.0
        %417 = vmatpush1.xpose.msra.mxu0 %v321
        %418 = vmatprep.subr.mxu0 0.0
        %419 = vmatpush1.xpose.msra.mxu0 %v318
        %420 = vmatprep.subr.mxu0 0.0
        %421 = vmatpush1.xpose.msra.mxu0 %v315
        %422 = vmatprep.subr.mxu0 0.0
        %423 = vmatpush1.xpose.msra.mxu0 %v312
        %424 = vmatprep.subr.mxu0 0.0
        %425 = vmatpush1.xpose.msra.mxu0 %v309
        %426 = vmatprep.subr.mxu0 0.0
        %427 = vmatpush1.xpose.msra.mxu0 %v306
        %428 = vmatprep.subr.mxu0 0.0
        %429 = vmatpush1.xpose.msra.mxu0 %v303
        %430 = vmatprep.subr.mxu0 0.0
        %431 = vmatpush2.xpose.msra.mxu0 %v396
        %432 = vmatprep.subr.mxu0 0.0
        %433 = vmatpush2.xpose.msra.mxu0 %v393
        %434 = vmatprep.subr.mxu0 0.0
        %435 = vmatpush2.xpose.msra.mxu0 %v390
        %436 = vmatprep.subr.mxu0 0.0
        %437 = vmatpush2.xpose.msra.mxu0 %v387
        %438 = vmatprep.subr.mxu0 0.0
        %439 = vmatpush2.xpose.msra.mxu0 %v384
        %440 = vmatprep.subr.mxu0 0.0
        %441 = vmatpush2.xpose.msra.mxu0 %v381
        %442 = vmatprep.subr.mxu0 0.0
        %443 = vmatpush2.xpose.msra.mxu0 %v378
        %444 = vmatprep.subr.mxu0 0.0
        %445 = vmatpush2.xpose.msra.mxu0 %v375
        %446 = vmatprep.subr.mxu0 0.0
        %447 = vmatpush2.xpose.msra.mxu0 %v372
        %448 = vmatprep.subr.mxu0 0.0
        %449 = vmatpush2.xpose.msra.mxu0 %v369
        %450 = vmatprep.subr.mxu0 0.0
        %451 = vmatpush2.xpose.msra.mxu0 %v366
        %452 = vmatprep.subr.mxu0 0.0
        %453 = vmatpush2.xpose.msra.mxu0 %v363
        %454 = vmatprep.subr.mxu0 0.0
        %455 = vmatpush2.xpose.msra.mxu0 %v360
        %456 = vmatprep.subr.mxu0 0.0
        %457 = vmatpush2.xpose.msra.mxu0 %v357
        %458 = vmatprep.subr.mxu0 0.0
        %459 = vmatpush2.xpose.msra.mxu0 %v354
        %460 = vmatprep.subr.mxu0 0.0
        %461 = vmatpush2.xpose.msra.mxu0 %v351
        %462 = vmatprep.mubr.f32.mxu0 0.0
        %463 = vmatmul.mubr.f32.gmra.mxu0 %v300
        %v464 = vpop.f32.mrf.mxu0
        %v465 = vadd.f32 0.0, %v464
        %v466 = vpop.f32.mrf.mxu0
        %v467 = vadd.f32 0.0, %v466
        %468 = vdwg.mxu0
        %v469 = vld [vmem:[%s255] ss:$2 sm:$0x3]
        %s470 = scalar_lea.vmem %s255, 1
        %v471 = vld [vmem:[%s470] ss:$2 sm:$0x3]
        %v472 = vmul.f32 %v465, 2.0
        %v473 = vmul.f32 %v467, 2.0
        %v475 = vlaneseq
        %v476 = vshrl.u32 %v475, 7
        %v477 = vsub.s32 0, %v476
        %v478 = vrot.slane %v469, %v477
        %v479 = vlaneseq
        %v480 = vshrl.u32 %v479, 7
        %v481 = vsub.s32 1, %v480
        %v482 = vrot.slane %v469, %v481
        %v485 = vsub.f32 %v478, %v472
        %v486 = vsub.f32 %v482, %v473
        %v487 = vld [vmem:[%s3] sm:$0xff]
        %489 = vset.pattern.permute.xlu0 0
        %490 = vperm.xlu0 %489, %v487
        %v491 = vpop.permute.xlu0 %490
        %v493 = vadd.f32 %v485, %v491
        %v494 = vadd.f32 %v486, %v491
        %v495 = vmax.f32 %v493, 0.0
        %v496 = vmax.f32 %v494, 0.0
        %v497 = vrsqrt.pop %v495
        %v498 = vmul.f32 %v495, %v497
        %vm499 = vcmp.eq.f32.partialorder %v495, inf
        %v500 = vsel %vm499, %v495, %v498
        %vm501 = vcmp.eq.f32.partialorder %v495, 0.0
        %v502 = vand.u32 %v495, 2147483648
        %v503 = vsel %vm501, %v502, %v500
        %v504 = vrsqrt.pop %v496
        %v505 = vmul.f32 %v496, %v504
        %vm506 = vcmp.eq.f32.partialorder %v496, inf
        %v507 = vsel %vm506, %v496, %v505
        %vm508 = vcmp.eq.f32.partialorder %v496, 0.0
        %v509 = vand.u32 %v496, 2147483648
        %v510 = vsel %vm508, %v509, %v507
        %v512 = vlaneseq
        %v513 = vshrl.u32 %v512, 7
        %v514 = vsub.s32 0, %v513
        %v515 = vrot.slane %v471, %v514
        %v516 = vlaneseq
        %v517 = vshrl.u32 %v516, 7
        %v518 = vsub.s32 1, %v517
        %v519 = vrot.slane %v471, %v518
        %v522 = vsub.f32 %v503, %v515
        %v523 = vsub.f32 %v510, %v519
        %v524 = vmul.f32 %v522, %v522
        %v525 = vmul.f32 %v523, %v523
        %s526 = smul.u32 %s22, 2
        %s527 = sadd.s32 %s526, %s23
        %s528 = smul.u32 %s527, 256
        %v529 = vlaneseq
        %v530 = vand.u32 %v529, 127
        %v531 = vadd.s32 %v530, 128
        %v532 = vstv %s528
        %v533 = vadd.s32 %v532, %v530
        %v534 = vadd.s32 %v532, %v531
        %vm535 = vcmp.lt.s32.totalorder %v533, 1000
        %vm536 = vcmp.lt.s32.totalorder %v534, 1000
        %v537 = vsel %vm535, 1, 0
        %v538 = vsel %vm536, 1, 0
        %vm539 = vcmp.eq.s32.totalorder %v537, 1
        %vm540 = vcmp.eq.s32.totalorder %v538, 1
        %v541 = vsel %vm539, %v524, 0.0
        %v542 = vsel %vm540, %v525, 0.0
        %v543 = vld [vmem:[%s238] sm:$0x1]
        %v544 = vadd.f32 %v541, %v542
        %545 = vadd.xlane.f32.xlu0 %v544
        %v546 = vpop.xlane.xlu0 %545
        %v547 = vmul.f32 %v546, 0.5
        %v549 = vlaneseq
        %v550 = vshrl.u32 %v549, 7
        %v551 = vsub.s32 0, %v550
        %v552 = vrot.slane %v547, %v551
        %v553 = vlaneseq
        %v554 = vshrl.u32 %v553, 7
        %v555 = vsub.s32 1, %v554
        %v556 = vrot.slane %v547, %v555
        %v557 = vlaneseq
        %v558 = vshrl.u32 %v557, 7
        %v559 = vsub.s32 2, %v558
        %v560 = vrot.slane %v547, %v559
        %v561 = vlaneseq
        %v562 = vshrl.u32 %v561, 7
        %v563 = vsub.s32 3, %v562
        %v564 = vrot.slane %v547, %v563
        %v565 = vlaneseq
        %v566 = vshrl.u32 %v565, 7
        %v567 = vsub.s32 4, %v566
        %v568 = vrot.slane %v547, %v567
        %v569 = vlaneseq
        %v570 = vshrl.u32 %v569, 7
        %v571 = vsub.s32 5, %v570
        %v572 = vrot.slane %v547, %v571
        %v573 = vlaneseq
        %v574 = vshrl.u32 %v573, 7
        %v575 = vsub.s32 6, %v574
        %v576 = vrot.slane %v547, %v575
        %v577 = vlaneseq
        %v578 = vshrl.u32 %v577, 7
        %v579 = vsub.s32 7, %v578
        %v580 = vrot.slane %v547, %v579
        %v581 = vcombine.low %v552, %v556
        %v582 = vcombine.low %v560, %v564
        %v583 = vcombine.low %v568, %v572
        %v584 = vcombine.low %v576, %v580
        %v586 = vunpack.c.l.s4 1966171168
        %v587 = vunpack.c.0.s8 %v586
        %v588 = vlaneseq
        %v589 = vshrl.u32 %v588, 7
        %v590 = vsub.s32 %v587, %v589
        %v591 = vrot.slane %v581, %v590
        %v593 = vunpack.c.l.s4 1966171168
        %v594 = vunpack.c.0.s8 %v593
        %v595 = vlaneseq
        %v596 = vshrl.u32 %v595, 7
        %v597 = vsub.s32 %v594, %v596
        %v598 = vrot.slane %v582, %v597
        %v600 = vunpack.c.l.s4 1966171168
        %v601 = vunpack.c.0.s8 %v600
        %v602 = vlaneseq
        %v603 = vshrl.u32 %v602, 7
        %v604 = vsub.s32 %v601, %v603
        %v605 = vrot.slane %v583, %v604
        %v607 = vunpack.c.l.s4 1966171168
        %v608 = vunpack.c.0.s8 %v607
        %v609 = vlaneseq
        %v610 = vshrl.u32 %v609, 7
        %v611 = vsub.s32 %v608, %v610
        %v612 = vrot.slane %v584, %v611
        %v613 = vcombine.low %v591, %v598
        %v614 = vcombine.low %v605, %v612
        %v616 = vunpack.c.l.s4 1966171168
        %v617 = vunpack.c.0.s8 %v616
        %v618 = vlaneseq
        %v619 = vshrl.u32 %v618, 7
        %v620 = vsub.s32 %v617, %v619
        %v621 = vrot.slane %v613, %v620
        %v623 = vunpack.c.l.s4 1966171168
        %v624 = vunpack.c.0.s8 %v623
        %v625 = vlaneseq
        %v626 = vshrl.u32 %v625, 7
        %v627 = vsub.s32 %v624, %v626
        %v628 = vrot.slane %v614, %v627
        %v629 = vcombine.low %v621, %v628
        %630 = vset.pattern.permute.xlu0 0
        %631 = vperm.xlu0 %630, %v629
        %v632 = vpop.permute.xlu0 %631
        %v633 = vlaneseq
        %v634 = vshrl.u32 %v633, 7
        %v635 = vsub.s32 %v530, %v634
        %v636 = vrot.slane %v632, %v635
        %v638 = vunpack.c.l.s4 1966171168
        %v639 = vunpack.c.0.s8 %v638
        %v640 = vlaneseq
        %v641 = vshrl.u32 %v640, 7
        %v642 = vsub.s32 %v639, %v641
        %v643 = vrot.slane %v636, %v642
        %v645 = vunpack.c.l.s4 1966171168
        %v646 = vunpack.c.0.s8 %v645
        %v647 = vlaneseq
        %v648 = vshrl.u32 %v647, 7
        %v649 = vsub.s32 %v646, %v648
        %v650 = vrot.slane %v643, %v649
        %v652 = vadd.f32 %v543, %v650
        %vm653 = vcmask 57344
        %654 = vst.msk [vmem:[%s238] sm:$0x1] %vm653, %v652
        %s655 = sand.u32 %s140, 1
        %s656 = scalar_lea.sflag [#allocation3], %s655
        %s657 = sand.u32 %s140, 1
        %s658 = scalar_lea.vmem [#allocation2], %s657
        // Predicated region
        $region41: #{tpu_custom_call.1} parent=35 // pred_check
          %p659 = pneg %p150
        $region42: #{tpu_custom_call.1} parent=35 // pred_check_branch
          %661 = sbr.rel (%p659) target = $region44
        $region43: #{tpu_custom_call.1} parent=35 // pred_region
          %s663 = ssub.s32 16, 16
          %664 = vsyncadd %s656, %s663
          %s665 = smul.addr %s22, 16
          %s666 = scalar_lea.hbm %s4, %s665
          %s668 = sshll.u32 %s658, 4
          %s669 = int_to_ptr.vmem [resolvable:$true] %s668
          %671 = dma.vmem_to_hbm [thread:$0]  %s669, 16, %s666, %s656
        $region44: #{tpu_custom_call.1} parent=35 // pred_fallthru
          _
      $region36: #{tpu_custom_call.1} parent=5 // pred_fallthru
        _
      %p672 = scmp.le.s32.totalorder 2, %s13
      // Predicated region
      $region45: #{tpu_custom_call.1} parent=5 // pred_check
        %p673 = pneg %p672
      $region46: #{tpu_custom_call.1} parent=5 // pred_check_branch
        %675 = sbr.rel (%p673) target = $region48
      $region47: #{tpu_custom_call.1} parent=5 // pred_region
        %s676 = ssub.s32 %s13, 2
        // Predicated region
        $region49: #{tpu_custom_call.1} parent=47 // pred_check
          %p677 = pneg %p156
        $region50: #{tpu_custom_call.1} parent=47 // pred_check_branch
          %679 = sbr.rel (%p677) target = $region52
        $region51: #{tpu_custom_call.1} parent=47 // pred_region
          %s680 = sand.u32 %s141, 1
          %s681 = scalar_lea.sflag [#allocation3], %s680
          %s682 = sand.u32 %s141, 1
          %s683 = scalar_lea.vmem [#allocation2], %s682
          %684 = dma.done %s681, 16
        $region52: #{tpu_custom_call.1} parent=47 // pred_fallthru
          _
      $region48: #{tpu_custom_call.1} parent=5 // pred_fallthru
        _
    $region6: #{tpu_custom_call.1} parent=1 // loop_footer
      %s17 = sadd.s32 1, %s13
    $region7: #{tpu_custom_call.1} parent=1 // loop_footer_branch
      %12 = sbr.rel target = $region3
    $region8: #{tpu_custom_call.1} parent=1 // loop_exit
      _
    %685 = vsyncpa [#allocation3], 1
    %s686 = scalar_lea.sflag [#allocation3], 1
    %687 = vsyncpa %s686, 1

</llo_original>
